<compile_context>
chip_gen: v7x
topology: tpu7x:2x2x1
jax: 0.10.0
libtpu: 0.0.40
codegen_flags: <defaults>
</compile_context>

<pallas_src>
import functools

import jax
import jax.numpy as jnp
from jax import lax
from jax.experimental import pallas as pl
from jax.experimental.pallas import tpu as pltpu

EPS = 1e-8  # torch.cosine_similarity default eps


def _cos_sqerr_tile_kernel(u_ref, v_ref, lbl_ref, out_ref, *, total_rows):
    """One batch tile: row-wise cosine similarity vs labels -> sum of err^2."""
    tb = u_ref.shape[0]

    u = u_ref[...].astype(jnp.float32)                      # (tb, D)
    v = v_ref[...].astype(jnp.float32)                      # (tb, D)
    lbl = lbl_ref[0]                                        # (tb, 1) column block

    dot = jnp.sum(u * v, axis=-1, keepdims=True)            # (tb, 1)
    nu2 = jnp.sum(u * u, axis=-1, keepdims=True)            # (tb, 1)
    nv2 = jnp.sum(v * v, axis=-1, keepdims=True)            # (tb, 1)
    # Per-norm eps clamp (max(||u||,eps) * max(||v||,eps)); two rsqrts on the
    # EUP avoid overflow of nu2*nv2 and are free under the DMA stream.
    inv_nu = lax.rsqrt(jnp.maximum(nu2, EPS * EPS))
    inv_nv = lax.rsqrt(jnp.maximum(nv2, EPS * EPS))
    cos = dot * inv_nu * inv_nv                              # (tb, 1)

    err = cos - lbl
    err2 = err * err

    # Ragged tail tile: rows >= total_rows were read out-of-bounds (unspecified
    # values) -- mask their contribution to exactly zero.  Static no-op when
    # the batch divides the tile.
    if total_rows % tb != 0:
        row0 = pl.program_id(0) * tb
        rows = row0 + lax.broadcasted_iota(jnp.int32, (tb, 1), 0)
        err2 = jnp.where(rows < total_rows, err2, 0.0)

    # One sublane reduction -> per-tile scalar partial sum (tiny, lane-cheap).
    out_ref[...] = jnp.sum(err2).reshape(1, 1, 1)


def _vmem_capacity_bytes():
    """Physical per-core VMEM; falls back to 128 MiB if the query is unavailable."""
    try:
        return int(pltpu.get_tpu_info().vmem_capacity_bytes)
    except Exception:  # pragma: no cover - e.g. interpret mode
        return 128 << 20


def _auto_batch_tile(B, D, itemsize, vmem_cap, sub):
    """Largest sublane-aligned batch tile sized on the f32 compute footprint.

    ~8 MiB per (tb, D) f32 block on 128 MiB-VMEM parts (v5e/v6e), ~4 MiB on
    64 MiB parts (v7x): 2 inputs x 2 pipeline buffers plus the casted f32
    intermediates stay comfortably inside physical VMEM on every generation.
    """
    target_f32_block_bytes = (8 << 20) if vmem_cap >= (96 << 20) else (4 << 20)
    tb = target_f32_block_bytes // max(1, D * 4)       # f32 compute footprint
    tb = max(sub, (int(tb) // sub) * sub)              # dtype sublane multiple
    b_up = ((B + sub - 1) // sub) * sub
    return min(tb, b_up)


def cosine_similarity_mse_loss(u, v, labels, *, tb=None):
    """MSE( cosine_similarity(u, v), labels ) computed in a Pallas TPU kernel.

    u, v:    [B, D] embeddings (f32 or bf16)
    labels:  [B]    float targets
    returns: scalar f32 loss
    """
    B, D = u.shape
    assert v.shape == (B, D)
    itemsize = max(jnp.dtype(u.dtype).itemsize, jnp.dtype(v.dtype).itemsize)
    sub = max(8, 32 // max(1, itemsize))     # 8 for f32, 16 for bf16, 32 for int8
    vmem_cap = _vmem_capacity_bytes()

    if tb is None:
        tb = _auto_batch_tile(B, D, itemsize, vmem_cap, sub)
    assert tb % sub == 0, f"batch tile must be a multiple of {sub} for this dtype"

    n_tiles = -(-B // tb)
    Bp = n_tiles * tb

    # Only the tiny label vector is padded; u / v stream unpadded straight from
    # HBM and the ragged last tile is masked inside the kernel.
    lbl = labels.reshape(-1).astype(jnp.float32)
    if Bp != B:
        lbl = jnp.pad(lbl, (0, Bp - B))
    lbl3d = lbl.reshape(n_tiles, tb, 1)

    # Scoped-VMEM budget: double-buffered u/v blocks + per-tile label blocks
    # (column layout lane-pads to tb*512 B/buffer) + per-tile scalar output,
    # with margin; capped at ~80% of physical VMEM (important on v7x's 64 MiB).
    in_block = tb * D * itemsize
    lbl_block = tb * 128 * 4
    out_block = 8 * 128 * 4
    pipeline = 2 * (2 * in_block + lbl_block + out_block)
    cap = min(max((vmem_cap * 4) // 5, 32 << 20), 100 << 20)
    vmem_limit = int(min(max(pipeline + (8 << 20), 32 << 20), cap))

    kernel = functools.partial(_cos_sqerr_tile_kernel, total_rows=B)

    tile_sums = pl.pallas_call(
        kernel,
        out_shape=jax.ShapeDtypeStruct((n_tiles, 1, 1), jnp.float32),
        grid_spec=pltpu.PrefetchScalarGridSpec(
            num_scalar_prefetch=0,
            grid=(n_tiles,),
            in_specs=[
                pl.BlockSpec((tb, D), lambda i: (i, 0)),        # u tile
                pl.BlockSpec((tb, D), lambda i: (i, 0)),        # v tile
                pl.BlockSpec((1, tb, 1), lambda i: (i, 0, 0)),  # labels, per tile
            ],
            out_specs=pl.BlockSpec((1, 1, 1), lambda i: (i, 0, 0)),
        ),
        compiler_params=pltpu.CompilerParams(
            # No cross-step dependency -> megacore-shardable on v7x.
            dimension_semantics=("parallel",),
            vmem_limit_bytes=vmem_limit,
        ),
    )(u, v, lbl3d)

    # Tiny final reduction over n_tiles partial sums; divide by the TRUE batch
    # size exactly once (masked tail rows contributed exactly zero).
    return jnp.sum(tile_sums) / jnp.float32(B)


def cosine_similarity_loss_forward(
    embeddings_a_pooled,
    embeddings_b_pooled,
    labels,
    main_loss_weight=1.0,
    mlm_loss_weight=1.0,
    mam_loss_weight=1.0,
):
    """Mirrors CosineSimilarityLoss.forward returns: (sim, mlm, mam, total).

    cos_score_transformation is the default identity; loss_fct is MSE.
    mlm_head / mam_head are None in this synthetic setup -> their losses are 0.
    """
    # TODO(synk): SentenceTransformer / archModel / mlm_head / mam_head sub-model
    # forward passes are external networks and are not reproduced here; their
    # pooled embeddings are provided as inputs.
    sim_loss = cosine_similarity_mse_loss(
        embeddings_a_pooled, embeddings_b_pooled, labels
    )
    mlm_loss = jnp.float32(0.0)
    mam_loss = jnp.float32(0.0)
    total = (
        mlm_loss_weight * mlm_loss
        + mam_loss_weight * mam_loss
        + main_loss_weight * sim_loss
    )
    return sim_loss, mlm_loss, mam_loss, total


def _reference_loss(u, v, labels):
    """Plain-JAX reference with torch's per-norm eps clamp."""
    nu = jnp.maximum(jnp.linalg.norm(u, axis=-1), EPS)
    nv = jnp.maximum(jnp.linalg.norm(v, axis=-1), EPS)
    cos = jnp.sum(u * v, axis=-1) / (nu * nv)
    return jnp.mean((cos - labels.reshape(-1)) ** 2)


if __name__ == "__main__":
    key = jax.random.PRNGKey(0)
    k_u, k_v, k_l, k_u2, k_v2, k_l2 = jax.random.split(key, 6)

    # Test 1: small synthetic batch of pooled embeddings (single tile).
    B, D = 16, 128
    u = jax.random.normal(k_u, (B, D), dtype=jnp.float32)
    v = jax.random.normal(k_v, (B, D), dtype=jnp.float32)
    labels = jax.random.uniform(k_l, (B,), dtype=jnp.float32)

    sim_loss, mlm_loss, mam_loss, total = cosine_similarity_loss_forward(u, v, labels)
    jax.block_until_ready(total)
    ref = _reference_loss(u, v, labels)
    assert jnp.allclose(sim_loss, ref, atol=1e-5, rtol=1e-5), (sim_loss, ref)

    # Test 2: multi-tile grid with a ragged tail tile (exercises the in-kernel
    # mask path that replaced the wrapper-side jnp.pad of u / v).
    B2, D2 = 20, 128
    u2 = jax.random.normal(k_u2, (B2, D2), dtype=jnp.float32)
    v2 = jax.random.normal(k_v2, (B2, D2), dtype=jnp.float32)
    labels2 = jax.random.uniform(k_l2, (B2,), dtype=jnp.float32)

    loss2 = cosine_similarity_mse_loss(u2, v2, labels2, tb=8)
    jax.block_until_ready(loss2)
    ref2 = _reference_loss(u2, v2, labels2)
    assert jnp.allclose(loss2, ref2, atol=1e-5, rtol=1e-5), (loss2, ref2)

    print("KERNEL_OK")
</pallas_src>

<mosaic_0001>
module attributes {stable_mosaic.version = 11 : i64} {
  func.func @_cos_sqerr_tile_kernel(%arg0: i32, %arg1: memref<16x128xf32, #tpu.memory_space<vmem>>, %arg2: memref<16x128xf32, #tpu.memory_space<vmem>>, %arg3: memref<1x16x1xf32, #tpu.memory_space<vmem>>, %arg4: memref<1x1x1xf32, #tpu.memory_space<vmem>>) attributes {dimension_semantics = [#tpu.dimension_semantics<parallel>], iteration_bounds = array<i64: 1>, scalar_prefetch = 0 : i64, scratch_operands = 0 : i64, tpu.core_type = #tpu.core_type<tc>, window_params = [{transform_indices = @transform_0, window_bounds = array<i64: 16, 128>}, {transform_indices = @transform_1, window_bounds = array<i64: 16, 128>}, {transform_indices = @transform_2, window_bounds = array<i64: 1, 16, 1>}, {transform_indices = @transform_3, window_bounds = array<i64: 1, 1, 1>}]} {
    %c0 = arith.constant 0 : index
    %c0_0 = arith.constant 0 : index
    %0 = vector.load %arg1[%c0, %c0_0] : memref<16x128xf32, #tpu.memory_space<vmem>>, vector<16x128xf32>
    %c0_1 = arith.constant 0 : index
    %c0_2 = arith.constant 0 : index
    %1 = vector.load %arg2[%c0_1, %c0_2] : memref<16x128xf32, #tpu.memory_space<vmem>>, vector<16x128xf32>
    %c0_3 = arith.constant 0 : index
    %c0_4 = arith.constant 0 : index
    %c0_5 = arith.constant 0 : index
    %2 = vector.load %arg3[%c0_3, %c0_4, %c0_5] : memref<1x16x1xf32, #tpu.memory_space<vmem>>, vector<1x16x1xf32>
    %3 = vector.shape_cast %2 : vector<1x16x1xf32> to vector<16x1xf32>
    %4 = arith.mulf %0, %1 : vector<16x128xf32>
    %cst = arith.constant dense<0.000000e+00> : vector<16xf32>
    %5 = vector.multi_reduction <add>, %4, %cst [1] : vector<16x128xf32> to vector<16xf32>
    %6 = vector.shape_cast %5 : vector<16xf32> to vector<16x1xf32>
    %7 = arith.mulf %0, %0 : vector<16x128xf32>
    %cst_6 = arith.constant dense<0.000000e+00> : vector<16xf32>
    %8 = vector.multi_reduction <add>, %7, %cst_6 [1] : vector<16x128xf32> to vector<16xf32>
    %9 = vector.shape_cast %8 : vector<16xf32> to vector<16x1xf32>
    %10 = arith.mulf %1, %1 : vector<16x128xf32>
    %cst_7 = arith.constant dense<0.000000e+00> : vector<16xf32>
    %11 = vector.multi_reduction <add>, %10, %cst_7 [1] : vector<16x128xf32> to vector<16xf32>
    %12 = vector.shape_cast %11 : vector<16xf32> to vector<16x1xf32>
    %cst_8 = arith.constant 1.000000e-16 : f32
    %13 = vector.broadcast %cst_8 : f32 to vector<16x1xf32>
    %14 = arith.maximumf %9, %13 : vector<16x1xf32>
    %15 = math.rsqrt %14 : vector<16x1xf32>
    %cst_9 = arith.constant 1.000000e-16 : f32
    %16 = vector.broadcast %cst_9 : f32 to vector<16x1xf32>
    %17 = arith.maximumf %12, %16 : vector<16x1xf32>
    %18 = math.rsqrt %17 : vector<16x1xf32>
    %19 = arith.mulf %6, %15 : vector<16x1xf32>
    %20 = arith.mulf %19, %18 : vector<16x1xf32>
    %21 = arith.subf %20, %3 : vector<16x1xf32>
    %22 = arith.mulf %21, %21 : vector<16x1xf32>
    %23 = vector.shape_cast %22 : vector<16x1xf32> to vector<1x16x1xf32>
    %cst_10 = arith.constant dense<0.000000e+00> : vector<1xf32>
    %24 = vector.multi_reduction <add>, %23, %cst_10 [1, 2] : vector<1x16x1xf32> to vector<1xf32>
    %25 = vector.shape_cast %24 : vector<1xf32> to vector<1x1x1xf32>
    %26 = vector.extract %25[0, 0, 0] : f32 from vector<1x1x1xf32>
    %27 = vector.broadcast %26 : f32 to vector<1x1x1xf32>
    %c0_11 = arith.constant 0 : index
    %c0_12 = arith.constant 0 : index
    %c0_13 = arith.constant 0 : index
    %28 = vector.load %arg4[%c0_11, %c0_12, %c0_13] : memref<1x1x1xf32, #tpu.memory_space<vmem>>, vector<1x1x1xf32>
    tpu.vector_store %arg4[%c0_11, %c0_12, %c0_13], %27 {strides = array<i32>} : memref<1x1x1xf32, #tpu.memory_space<vmem>>, vector<1x1x1xf32>,
    return
  }
  func.func @transform_0(%arg0: i32) -> (i32, i32) {
    %c0_i32 = arith.constant 0 : i32
    %c0_i32_0 = arith.constant 0 : i32
    return %arg0, %c0_i32 : i32, i32
  }
  func.func @transform_1(%arg0: i32) -> (i32, i32) {
    %c0_i32 = arith.constant 0 : i32
    %c0_i32_0 = arith.constant 0 : i32
    return %arg0, %c0_i32 : i32, i32
  }
  func.func @transform_2(%arg0: i32) -> (i32, i32, i32) {
    %c0_i32 = arith.constant 0 : i32
    %c0_i32_0 = arith.constant 0 : i32
    %c0_i32_1 = arith.constant 0 : i32
    return %arg0, %c0_i32, %c0_i32_0 : i32, i32, i32
  }
  func.func @transform_3(%arg0: i32) -> (i32, i32, i32) {
    %c0_i32 = arith.constant 0 : i32
    %c0_i32_0 = arith.constant 0 : i32
    %c0_i32_1 = arith.constant 0 : i32
    return %arg0, %c0_i32, %c0_i32_0 : i32, i32, i32
  }
}

</mosaic_0001>

<llo_original>
// kernel: tpu_custom_call.1
$region0: #{tpu_custom_call.1}
  #allocation0 [shape = 'u32[]', space=smem, size = 0x4, offset = 0x4, fixed_abs, tag = 'smem constant byte address 0x4 - core index']
  #allocation1 [shape = 'u32[144,128]{1,0:T(1,128)}', space=vmem, size = 0x12000, scoped, tag = 'internal scratch']
  %s0 = inlined_call_operand.vmem [shape: f32[16,128], index: 0, kind: input, shape index: {}]
  %s1 = inlined_call_operand.hbm [shape: f32[16,128], index: 1, kind: input, shape index: {}]
  %s2 = inlined_call_operand.vmem [shape: f32[1,16,1], index: 2, kind: input, shape index: {}]
  %s3 = inlined_call_operand.hbm [shape: f32[1,1,1], index: 3, kind: output, shape index: {}]
  %s4 = sld [smem:[#allocation0]]
  $region26: #{tpu_custom_call.1} parent=0
    _
  %s6 = ssub.s32 1, %s4
  %s7 = scalar_select 0, %s6, %s4
  $region1: #{tpu_custom_call.1} parent=0
    #allocation2 [shape = 'u8[8192]{0}', space=vmem, size = 0x2000, scoped, tag = 'input window, operand 1, single buffered']
    #allocation3 [shape = 's32[1]{0}', space=sflag, size = 0x4, scoped, tag = 'scoped memory for tpu_custom_call.1']
    #allocation4 [shape = 's32[1]{0}', space=sflag, size = 0x4, scoped, tag = 'scoped memory for tpu_custom_call.1']
    #allocation5 [shape = 'u8[512]{0}', space=vmem, size = 0x400, scoped, tag = 'output window, operand 0, single buffered']
    %8 = vsyncpa [#allocation3], 0
    %9 = vsyncpa [#allocation4], 0
    // Predicated region
    $region2: #{tpu_custom_call.1} parent=1 // pred_check
      _
    $region3: #{tpu_custom_call.1} parent=1 // pred_check_branch
      %11 = sbr.rel (0) target = $region5
    $region4: #{tpu_custom_call.1} parent=1 // pred_region
      _
    $region5: #{tpu_custom_call.1} parent=1 // pred_fallthru
      _
    // Predicated region
    $region6: #{tpu_custom_call.1} parent=1 // pred_check
      _
    $region7: #{tpu_custom_call.1} parent=1 // pred_check_branch
      %13 = sbr.rel (0) target = $region9
    $region8: #{tpu_custom_call.1} parent=1 // pred_region
      %s15 = ssub.s32 256, 256
      %16 = vsyncadd [#allocation3], %s15
      %s17 = sshll.u32 [#allocation2], 4
      %s18 = int_to_ptr.vmem [resolvable:$true] %s17
      %23 = dma.hbm_to_vmem [thread:$0]  %s1, 256, %s18, [#allocation3], 128, 128, 8
    $region9: #{tpu_custom_call.1} parent=1 // pred_fallthru
      _
    // Predicated region
    $region10: #{tpu_custom_call.1} parent=1 // pred_check
      _
    $region11: #{tpu_custom_call.1} parent=1 // pred_check_branch
      %25 = sbr.rel (0) target = $region13
    $region12: #{tpu_custom_call.1} parent=1 // pred_region
      _
    $region13: #{tpu_custom_call.1} parent=1 // pred_fallthru
      _
    // Predicated region
    $region14: #{tpu_custom_call.1} parent=1 // pred_check
      _
    $region15: #{tpu_custom_call.1} parent=1 // pred_check_branch
      %27 = sbr.rel (0) target = $region17
    $region16: #{tpu_custom_call.1} parent=1 // pred_region
      %28 = dma.done [#allocation3], 256
    $region17: #{tpu_custom_call.1} parent=1 // pred_fallthru
      _
    %v29 = vld [vmem:[%s0] sm:$0xff]
    %v30 = vld [vmem:[%s0 + $0x8] sm:$0xff]
    %v31 = vld [vmem:[#allocation2] sm:$0xff]
    %v32 = vld [vmem:[#allocation2 + $0x8] sm:$0xff]
    %v33 = vld [vmem:[%s2] sm:$0xff]
    %v34 = vld [vmem:[%s2 + $0x8] sm:$0xff]
    %v35 = vmul.f32 %v29, %v31
    %v36 = vmul.f32 %v30, %v32
    %37 = vadd.xlane.f32.xlu0 %v35
    %v38 = vpop.xlane.xlu0 %37
    %39 = vadd.xlane.f32.xlu0 %v36
    %v40 = vpop.xlane.xlu0 %39
    %v41 = vmul.f32 %v29, %v29
    %v42 = vmul.f32 %v30, %v30
    %43 = vadd.xlane.f32.xlu0 %v41
    %v44 = vpop.xlane.xlu0 %43
    %45 = vadd.xlane.f32.xlu0 %v42
    %v46 = vpop.xlane.xlu0 %45
    %v47 = vmul.f32 %v31, %v31
    %v48 = vmul.f32 %v32, %v32
    %49 = vadd.xlane.f32.xlu0 %v47
    %v50 = vpop.xlane.xlu0 %49
    %51 = vadd.xlane.f32.xlu0 %v48
    %v52 = vpop.xlane.xlu0 %51
    %v53 = vmax.f32 %v44, 1e-16
    %v54 = vmax.f32 %v46, 1e-16
    %v55 = vrsqrt.pop %v53
    %v56 = vrsqrt.pop %v54
    %v57 = vmax.f32 %v50, 1e-16
    %v58 = vmax.f32 %v52, 1e-16
    %v59 = vrsqrt.pop %v57
    %v60 = vrsqrt.pop %v58
    %v61 = vmul.f32 %v38, %v55
    %v62 = vmul.f32 %v40, %v56
    %v63 = vmul.f32 %v61, %v59
    %v64 = vmul.f32 %v62, %v60
    %v65 = vsub.f32 %v63, %v33
    %v66 = vsub.f32 %v64, %v34
    %v67 = vmul.f32 %v65, %v65
    %v68 = vmul.f32 %v66, %v66
    %vm69 = vcmask 7168
    %v70 = vsel %vm69, %v67, 0.0
    %v71 = vsel %vm69, %v68, 0.0
    %v72 = vadd.f32 %v70, %v71
    %73 = vadd.xlane.f32.xlu0 %v72
    %v74 = vpop.xlane.xlu0 %73
    %v75 = vrot.slane %v74, 4
    %v76 = vadd.f32 %v74, %v75
    %v77 = vrot.slane %v76, 2
    %v78 = vadd.f32 %v76, %v77
    %v79 = vrot.slane %v78, 1
    %v80 = vadd.f32 %v78, %v79
    %s81 = vtos %v80
    %v82 = vstv %s81
    %vm83 = vcmask 0
    %84 = vst.msk [vmem:[#allocation5] sm:$0x1] %vm83, %v82
    // Predicated region
    $region18: #{tpu_custom_call.1} parent=1 // pred_check
      _
    $region19: #{tpu_custom_call.1} parent=1 // pred_check_branch
      %86 = sbr.rel (0) target = $region21
    $region20: #{tpu_custom_call.1} parent=1 // pred_region
      %s88 = ssub.s32 16, 16
      %89 = vsyncadd [#allocation4], %s88
      %s91 = sshll.u32 [#allocation5], 4
      %s92 = int_to_ptr.vmem [resolvable:$true] %s91
      %94 = dma.vmem_to_hbm [thread:$0]  %s92, 16, %s3, [#allocation4]
    $region21: #{tpu_custom_call.1} parent=1 // pred_fallthru
      _
    // Predicated region
    $region22: #{tpu_custom_call.1} parent=1 // pred_check
      _
    $region23: #{tpu_custom_call.1} parent=1 // pred_check_branch
      %96 = sbr.rel (0) target = $region25
    $region24: #{tpu_custom_call.1} parent=1 // pred_region
      %97 = dma.done [#allocation4], 16
    $region25: #{tpu_custom_call.1} parent=1 // pred_fallthru
      _
    %98 = vsyncpa [#allocation3], 1
    %99 = vsyncpa [#allocation4], 1

</llo_original>
